<compile_context>
chip_gen: v7x
topology: tpu7x:2x2x1
jax: 0.10.0
libtpu: 0.0.40
codegen_flags: <defaults>
</compile_context>

<pallas_src>
import jax
import jax.numpy as jnp
from jax.experimental import pallas as pl
from jax.experimental.pallas import tpu as pltpu

EPS = 1e-6
NUM_GROUPS = 32


def group_norm_kernel(x_ref, gamma_ref, beta_ref, o_ref):
    # x_ref block : (rblk, D) with D = Cg*HW  (lane-dense rows)
    # gamma_ref / beta_ref : (G//rblk, rblk, D) f32, fully resident in VMEM
    rblk, d = x_ref.shape
    inv_n = 1.0 / float(d)                               # folded at trace time

    # --- pass 1: mean (streaming read of the tile) -------------------------
    x = x_ref[...].astype(jnp.float32)
    mean = jnp.sum(x, axis=-1, keepdims=True) * inv_n    # (rblk, 1)

    # --- pass 2: centered variance (re-read the tile; avoids E[x^2]-mean^2
    # cancellation, matches PyTorch GN numerics) -----------------------------
    x = x_ref[...].astype(jnp.float32)
    c = x - mean
    var = jnp.sum(c * c, axis=-1, keepdims=True) * inv_n  # (rblk, 1)
    inv = jax.lax.rsqrt(var + EPS)                         # (rblk, 1)

    # --- per-channel affine from the resident, pre-broadcast params --------
    gi = pl.program_id(0) % gamma_ref.shape[0]             # which rblk-chunk of groups
    gamma = gamma_ref[gi]                                   # (rblk, D), already f32
    beta = beta_ref[gi]                                     # (rblk, D), already f32
    a = gamma * inv
    b = beta - mean * a

    # --- pass 3: normalize + affine, single fused store --------------------
    x = x_ref[...].astype(jnp.float32)
    o_ref[...] = (x * a + b).astype(o_ref.dtype)


def _pick_rows_per_block(G, rows, row_bytes, sublane,
                         target_bytes=1 << 20, min_steps=8):
    """Pick rblk: a divisor of G, sublane-aligned if possible, with the block
    <= target_bytes and enough grid steps to pipeline on both v7x cores."""
    divisors = [d for d in range(1, G + 1) if G % d == 0]
    aligned = [d for d in divisors if d % sublane == 0]
    cands = aligned if aligned else divisors

    best = None
    # Prefer: largest rblk with block <= target and grid >= min_steps.
    for d in cands:
        if d * row_bytes <= target_bytes and rows // d >= min_steps:
            if best is None or d > best:
                best = d
    if best is None:
        # Relax step count: keep at least 2 steps (double-buffer still overlaps).
        for d in cands:
            if d * row_bytes <= target_bytes and rows // d >= 2:
                if best is None or d > best:
                    best = d
    if best is None:
        # Relax size: smallest (still aligned if possible) candidate.
        best = min(cands)
    return best


def group_norm(x, gamma, beta, num_groups=NUM_GROUPS):
    N, C, H, W = x.shape
    G = num_groups
    assert C % G == 0, "channels must be divisible by num_groups"
    Cg = C // G
    HW = H * W
    D = Cg * HW
    rows = N * G

    itemsize = x.dtype.itemsize
    sublane = 8 if itemsize == 4 else (16 if itemsize == 2 else 32)
    rblk = _pick_rows_per_block(G, rows, D * itemsize, sublane)
    assert G % rblk == 0 and rows % rblk == 0
    nch = G // rblk
    grid = (rows // rblk,)

    # Free row-major view: one lane-dense row per (batch, group).
    x2 = x.reshape(rows, D)

    # Hoisted param prep: cast to f32 + broadcast each channel value over HW,
    # chunked to match the row blocks.  Resident in VMEM for the whole grid.
    gamma3 = jnp.repeat(gamma.astype(jnp.float32).reshape(G, Cg), HW,
                        axis=1).reshape(nch, rblk, D)
    beta3 = jnp.repeat(beta.astype(jnp.float32).reshape(G, Cg), HW,
                       axis=1).reshape(nch, rblk, D)

    # Explicit scoped-VMEM sizing: 2x double-buffered in + out blocks plus the
    # resident params, floored at 16 MiB, capped at 48 MiB for v7x (64 MiB phys).
    block_bytes = rblk * D * itemsize
    param_bytes = 2 * G * D * 4
    vmem_need = 4 * block_bytes + 2 * param_bytes + (2 << 20)
    vmem_limit = int(min(max(vmem_need, 16 << 20), 48 << 20))

    out = pl.pallas_call(
        group_norm_kernel,
        out_shape=jax.ShapeDtypeStruct((rows, D), x.dtype),
        grid=grid,
        in_specs=[
            pl.BlockSpec((rblk, D), lambda r: (r, 0)),
            pl.BlockSpec((nch, rblk, D), lambda r: (0, 0, 0)),   # resident
            pl.BlockSpec((nch, rblk, D), lambda r: (0, 0, 0)),   # resident
        ],
        out_specs=pl.BlockSpec((rblk, D), lambda r: (r, 0)),
        compiler_params=pltpu.CompilerParams(
            dimension_semantics=("parallel",),
            vmem_limit_bytes=vmem_limit),
    )(x2, gamma3, beta3)

    return out.reshape(N, C, H, W)


def group_norm_ref(x, gamma, beta, num_groups=NUM_GROUPS):
    # pure-JAX reference for validation (two-pass, like PyTorch GN)
    N, C, H, W = x.shape
    G = num_groups
    xg = x.reshape(N, G, -1).astype(jnp.float32)
    mean = xg.mean(axis=-1, keepdims=True)
    var = ((xg - mean) ** 2).mean(axis=-1, keepdims=True)
    xhat = ((xg - mean) * jax.lax.rsqrt(var + EPS)).reshape(N, C, H, W)
    return (xhat * gamma.reshape(1, C, 1, 1) + beta.reshape(1, C, 1, 1)).astype(x.dtype)


if __name__ == "__main__":
    key = jax.random.PRNGKey(0)
    kx, kg, kb = jax.random.split(key, 3)

    N, C, H, W = 2, 64, 16, 16          # C must be divisible by 32 groups
    x = jax.random.normal(kx, (N, C, H, W), dtype=jnp.float32)

    # PyTorch default init is ones/zeros; perturb so the affine path is exercised.
    gamma = 1.0 + 0.1 * jax.random.normal(kg, (C,), dtype=jnp.float32)
    beta = 0.1 * jax.random.normal(kb, (C,), dtype=jnp.float32)

    out = group_norm(x, gamma, beta)
    out = jax.block_until_ready(out)

    ref = group_norm_ref(x, gamma, beta)
    assert out.shape == (N, C, H, W)
    assert jnp.allclose(out, ref, atol=1e-4, rtol=1e-4), "mismatch vs reference"

    print("KERNEL_OK")
</pallas_src>

<mosaic_0001>
module attributes {stable_mosaic.version = 11 : i64} {
  func.func @group_norm_kernel(%arg0: i32, %arg1: memref<8x512xf32, #tpu.memory_space<vmem>>, %arg2: memref<4x8x512xf32, #tpu.memory_space<vmem>>, %arg3: memref<4x8x512xf32, #tpu.memory_space<vmem>>, %arg4: memref<8x512xf32, #tpu.memory_space<vmem>>) attributes {dimension_semantics = [#tpu.dimension_semantics<parallel>], iteration_bounds = array<i64: 8>, scalar_prefetch = 0 : i64, scratch_operands = 0 : i64, tpu.core_type = #tpu.core_type<tc>, window_params = [{transform_indices = @transform_0, window_bounds = array<i64: 8, 512>}, {pipeline_mode = #tpu.pipeline_mode<synchronous>, transform_indices = @transform_1, window_bounds = array<i64: 4, 8, 512>}, {pipeline_mode = #tpu.pipeline_mode<synchronous>, transform_indices = @transform_2, window_bounds = array<i64: 4, 8, 512>}, {transform_indices = @transform_3, window_bounds = array<i64: 8, 512>}]} {
    %c0 = arith.constant 0 : index
    %c0_0 = arith.constant 0 : index
    %0 = vector.load %arg1[%c0, %c0_0] : memref<8x512xf32, #tpu.memory_space<vmem>>, vector<8x512xf32>
    %cst = arith.constant dense<0.000000e+00> : vector<8xf32>
    %1 = vector.multi_reduction <add>, %0, %cst [1] : vector<8x512xf32> to vector<8xf32>
    %2 = vector.shape_cast %1 : vector<8xf32> to vector<8x1xf32>
    %cst_1 = arith.constant 0.001953125 : f32
    %3 = vector.broadcast %cst_1 : f32 to vector<8x1xf32>
    %4 = arith.mulf %2, %3 : vector<8x1xf32>
    %c0_2 = arith.constant 0 : index
    %c0_3 = arith.constant 0 : index
    %5 = vector.load %arg1[%c0_2, %c0_3] : memref<8x512xf32, #tpu.memory_space<vmem>>, vector<8x512xf32>
    %6 = vector.broadcast %4 : vector<8x1xf32> to vector<8x512xf32>
    %7 = arith.subf %5, %6 : vector<8x512xf32>
    %8 = arith.mulf %7, %7 : vector<8x512xf32>
    %cst_4 = arith.constant dense<0.000000e+00> : vector<8xf32>
    %9 = vector.multi_reduction <add>, %8, %cst_4 [1] : vector<8x512xf32> to vector<8xf32>
    %10 = vector.shape_cast %9 : vector<8xf32> to vector<8x1xf32>
    %cst_5 = arith.constant 0.001953125 : f32
    %11 = vector.broadcast %cst_5 : f32 to vector<8x1xf32>
    %12 = arith.mulf %10, %11 : vector<8x1xf32>
    %cst_6 = arith.constant 9.99999997E-7 : f32
    %13 = vector.broadcast %cst_6 : f32 to vector<8x1xf32>
    %14 = arith.addf %12, %13 : vector<8x1xf32>
    %15 = math.rsqrt %14 : vector<8x1xf32>
    %c4_i32 = arith.constant 4 : i32
    %c0_i32 = arith.constant 0 : i32
    %16 = arith.cmpi eq, %c4_i32, %c0_i32 : i32
    %c1_i32 = arith.constant 1 : i32
    %17 = arith.select %16, %c1_i32, %c4_i32 : i32
    %18 = arith.remsi %arg0, %17 : i32
    %c0_i32_7 = arith.constant 0 : i32
    %19 = arith.cmpi ne, %18, %c0_i32_7 : i32
    %c0_i32_8 = arith.constant 0 : i32
    %20 = arith.cmpi slt, %18, %c0_i32_8 : i32
    %c0_i32_9 = arith.constant 0 : i32
    %21 = arith.cmpi slt, %17, %c0_i32_9 : i32
    %22 = arith.xori %20, %21 : i1
    %23 = arith.andi %22, %19 : i1
    %24 = arith.addi %18, %17 : i32
    %25 = arith.select %23, %24, %18 : i32
    %26 = arith.index_cast %25 : i32 to index
    %c0_10 = arith.constant 0 : index
    %c0_11 = arith.constant 0 : index
    %27 = vector.load %arg2[%26, %c0_10, %c0_11] : memref<4x8x512xf32, #tpu.memory_space<vmem>>, vector<1x8x512xf32>
    %28 = vector.shape_cast %27 : vector<1x8x512xf32> to vector<8x512xf32>
    %29 = arith.index_cast %25 : i32 to index
    %c0_12 = arith.constant 0 : index
    %c0_13 = arith.constant 0 : index
    %30 = vector.load %arg3[%29, %c0_12, %c0_13] : memref<4x8x512xf32, #tpu.memory_space<vmem>>, vector<1x8x512xf32>
    %31 = vector.shape_cast %30 : vector<1x8x512xf32> to vector<8x512xf32>
    %32 = vector.broadcast %15 : vector<8x1xf32> to vector<8x512xf32>
    %33 = arith.mulf %28, %32 : vector<8x512xf32>
    %34 = vector.broadcast %4 : vector<8x1xf32> to vector<8x512xf32>
    %35 = arith.mulf %34, %33 : vector<8x512xf32>
    %36 = arith.subf %31, %35 : vector<8x512xf32>
    %c0_14 = arith.constant 0 : index
    %c0_15 = arith.constant 0 : index
    %37 = vector.load %arg1[%c0_14, %c0_15] : memref<8x512xf32, #tpu.memory_space<vmem>>, vector<8x512xf32>
    %38 = arith.mulf %37, %33 : vector<8x512xf32>
    %39 = arith.addf %38, %36 : vector<8x512xf32>
    %c0_16 = arith.constant 0 : index
    %c0_17 = arith.constant 0 : index
    %40 = vector.load %arg4[%c0_16, %c0_17] : memref<8x512xf32, #tpu.memory_space<vmem>>, vector<8x512xf32>
    tpu.vector_store %arg4[%c0_16, %c0_17], %39 {strides = array<i32>} : memref<8x512xf32, #tpu.memory_space<vmem>>, vector<8x512xf32>,
    return
  }
  func.func @transform_0(%arg0: i32) -> (i32, i32) {
    %c0_i32 = arith.constant 0 : i32
    %c0_i32_0 = arith.constant 0 : i32
    return %arg0, %c0_i32 : i32, i32
  }
  func.func @transform_1(%arg0: i32) -> (i32, i32, i32) {
    %c0_i32 = arith.constant 0 : i32
    %c0_i32_0 = arith.constant 0 : i32
    %c0_i32_1 = arith.constant 0 : i32
    %c0_i32_2 = arith.constant 0 : i32
    return %c0_i32, %c0_i32_0, %c0_i32_1 : i32, i32, i32
  }
  func.func @transform_2(%arg0: i32) -> (i32, i32, i32) {
    %c0_i32 = arith.constant 0 : i32
    %c0_i32_0 = arith.constant 0 : i32
    %c0_i32_1 = arith.constant 0 : i32
    %c0_i32_2 = arith.constant 0 : i32
    return %c0_i32, %c0_i32_0, %c0_i32_1 : i32, i32, i32
  }
  func.func @transform_3(%arg0: i32) -> (i32, i32) {
    %c0_i32 = arith.constant 0 : i32
    %c0_i32_0 = arith.constant 0 : i32
    return %arg0, %c0_i32 : i32, i32
  }
}

</mosaic_0001>

<llo_original>
// kernel: tpu_custom_call.1
$region0: #{tpu_custom_call.1}
  #allocation0 [shape = 'u32[]', space=smem, size = 0x4, offset = 0x4, fixed_abs, tag = 'smem constant byte address 0x4 - core index']
  #allocation1 [shape = 'u32[144,128]{1,0:T(1,128)}', space=vmem, size = 0x12000, scoped, tag = 'internal scratch']
  %s0 = inlined_call_operand.hbm [shape: f32[64,512], index: 0, kind: input, shape index: {}]
  %s1 = inlined_call_operand.hbm [shape: f32[4,8,512], index: 1, kind: input, shape index: {}]
  %s2 = inlined_call_operand.hbm [shape: f32[4,8,512], index: 2, kind: input, shape index: {}]
  %s3 = inlined_call_operand.hbm [shape: f32[64,512], index: 3, kind: output, shape index: {}]
  %s4 = sld [smem:[#allocation0]]
  $region57: #{tpu_custom_call.1} parent=0
    _
  %s6 = ssub.s32 1, %s4
  %s7 = scalar_select 0, %s6, %s4
  $region1: #{tpu_custom_call.1} parent=0
    #allocation2 [shape = 'u8[32768]{0}', space=vmem, size = 0x8000, scoped, tag = 'input window, operand 0']
    #allocation3 [shape = 's32[2]{0}', space=sflag, size = 0x8, scoped, tag = 'scoped memory for tpu_custom_call.1']
    #allocation4 [shape = 's32[2]{0}', space=sflag, size = 0x8, scoped, tag = 'scoped memory for tpu_custom_call.1']
    #allocation5 [shape = 'u8[65536]{0}', space=vmem, size = 0x10000, scoped, tag = 'input window, operand 1, single buffered']
    #allocation6 [shape = 's32[1]{0}', space=sflag, size = 0x4, scoped, tag = 'scoped memory for tpu_custom_call.1']
    #allocation7 [shape = 'u8[65536]{0}', space=vmem, size = 0x10000, scoped, tag = 'input window, operand 2, single buffered']
    #allocation8 [shape = 'u8[32768]{0}', space=vmem, size = 0x8000, scoped, tag = 'output window, operand 0']
    %8 = vsyncpa [#allocation3], 0
    %s9 = scalar_lea.sflag [#allocation3], 1
    %10 = vsyncpa %s9, 0
    %11 = vsyncpa [#allocation6], 0
    %12 = vsyncpa [#allocation4], 0
    %s13 = scalar_lea.sflag [#allocation4], 1
    %14 = vsyncpa %s13, 0
    loop: start=0, step=1, limit=10
    $region2: #{tpu_custom_call.1} parent=1 // loop_pre_header
      _
    $region3: #{tpu_custom_call.1} parent=1 // loop_header
      %s16 = sphi 0, %s20
      %p17 = scmp.ge.s32.totalorder %s16, 10
      %s26 = sphi 0, %s28
      %s29 = sphi 0, %s26
      %s30 = sphi 0, %s29
      %s46 = sphi 0, %s30
      %s50 = sphi 0, %s50
      %s52 = sphi 0, %s50
      %s53 = sphi 0, %s52
      %s67 = sphi 0, %s53
      %s71 = sphi 0, %s71
      %s73 = sphi 0, %s71
      %s74 = sphi 0, %s73
      %s88 = sphi 0, %s74
      %s94 = sphi 0, %s96
      %s97 = sphi 0, %s94
      %s98 = sphi 0, %s97
      %s114 = sphi 0, %s98
    $region4: #{tpu_custom_call.1} parent=1 // loop_header_branch
      %19 = sbr.rel (%p17) target = $region8
    $region5: #{tpu_custom_call.1} parent=1 // loop_body
      %s21 = ssub.s32 %s16, 1
      %s22 = ssub.s32 %s16, 2
      %s23 = sadd.s32 %s16, 1
      %s24 = ssub.s32 %s16, %s23
      %p25 = scmp.eq.s32.totalorder %s24, 0
      %s27 = sadd.s32 %s26, 1
      %s28 = scalar_select %p25, %s26, %s27
      %p31 = pneg %p25
      %p32 = scmp.eq.s32.totalorder %s16, 7
      %p33 = por %p31, %p32
      %p34 = scmp.ne.s32.totalorder %s26, %s29
      %p35 = scmp.eq.s32.totalorder %s16, 0
      %p36 = por %p34, %p35
      %p37 = scmp.ne.s32.totalorder %s26, %s29
      %p38 = scmp.eq.s32.totalorder %s21, 7
      %p39 = por %p37, %p38
      %p40 = scmp.ne.s32.totalorder %s29, %s30
      %p41 = scmp.eq.s32.totalorder %s21, 0
      %p42 = por %p40, %p41
      %p43 = scmp.ne.s32.totalorder %s29, %s30
      %p44 = scmp.eq.s32.totalorder %s22, 7
      %p45 = por %p43, %p44
      %p47 = scmp.ne.s32.totalorder %s30, %s46
      %p48 = scmp.eq.s32.totalorder %s22, 0
      %p49 = por %p47, %p48
      %s51 = sadd.s32 %s50, 1
      %p54 = scmp.eq.s32.totalorder %s16, 7
      %p55 = scmp.ne.s32.totalorder %s50, %s52
      %p56 = scmp.eq.s32.totalorder %s16, 0
      %p57 = por %p55, %p56
      %p58 = scmp.ne.s32.totalorder %s50, %s52
      %p59 = scmp.eq.s32.totalorder %s21, 7
      %p60 = por %p58, %p59
      %p61 = scmp.ne.s32.totalorder %s52, %s53
      %p62 = scmp.eq.s32.totalorder %s21, 0
      %p63 = por %p61, %p62
      %p64 = scmp.ne.s32.totalorder %s52, %s53
      %p65 = scmp.eq.s32.totalorder %s22, 7
      %p66 = por %p64, %p65
      %p68 = scmp.ne.s32.totalorder %s53, %s67
      %p69 = scmp.eq.s32.totalorder %s22, 0
      %p70 = por %p68, %p69
      %s72 = sadd.s32 %s71, 1
      %p75 = scmp.eq.s32.totalorder %s16, 7
      %p76 = scmp.ne.s32.totalorder %s71, %s73
      %p77 = scmp.eq.s32.totalorder %s16, 0
      %p78 = por %p76, %p77
      %p79 = scmp.ne.s32.totalorder %s71, %s73
      %p80 = scmp.eq.s32.totalorder %s21, 7
      %p81 = por %p79, %p80
      %p82 = scmp.ne.s32.totalorder %s73, %s74
      %p83 = scmp.eq.s32.totalorder %s21, 0
      %p84 = por %p82, %p83
      %p85 = scmp.ne.s32.totalorder %s73, %s74
      %p86 = scmp.eq.s32.totalorder %s22, 7
      %p87 = por %p85, %p86
      %p89 = scmp.ne.s32.totalorder %s74, %s88
      %p90 = scmp.eq.s32.totalorder %s22, 0
      %p91 = por %p89, %p90
      %s92 = ssub.s32 %s16, %s23
      %p93 = scmp.eq.s32.totalorder %s92, 0
      %s95 = sadd.s32 %s94, 1
      %s96 = scalar_select %p93, %s94, %s95
      %p99 = pneg %p93
      %p100 = scmp.eq.s32.totalorder %s16, 7
      %p101 = por %p99, %p100
      %p102 = scmp.ne.s32.totalorder %s94, %s97
      %p103 = scmp.eq.s32.totalorder %s16, 0
      %p104 = por %p102, %p103
      %p105 = scmp.ne.s32.totalorder %s94, %s97
      %p106 = scmp.eq.s32.totalorder %s21, 7
      %p107 = por %p105, %p106
      %p108 = scmp.ne.s32.totalorder %s97, %s98
      %p109 = scmp.eq.s32.totalorder %s21, 0
      %p110 = por %p108, %p109
      %p111 = scmp.ne.s32.totalorder %s97, %s98
      %p112 = scmp.eq.s32.totalorder %s22, 7
      %p113 = por %p111, %p112
      %p115 = scmp.ne.s32.totalorder %s98, %s114
      %p116 = scmp.eq.s32.totalorder %s22, 0
      %p117 = por %p115, %p116
      %p118 = scmp.le.s32.totalorder 1, %s16
      %p119 = scmp.lt.s32.totalorder %s16, 9
      %p120 = pnand %p118, %p119
      %p121 = pneg %p120
      // Predicated region
      $region9: #{tpu_custom_call.1} parent=5 // pred_check
        _
      $region10: #{tpu_custom_call.1} parent=5 // pred_check_branch
        %123 = sbr.rel (%p120) target = $region12
      $region11: #{tpu_custom_call.1} parent=5 // pred_region
        %s124 = ssub.s32 %s16, 1
        // Predicated region
        $region13: #{tpu_custom_call.1} parent=11 // pred_check
          %p125 = pneg %p63
        $region14: #{tpu_custom_call.1} parent=11 // pred_check_branch
          %127 = sbr.rel (%p125) target = $region16
        $region15: #{tpu_custom_call.1} parent=11 // pred_region
          %s129 = ssub.s32 2048, 2048
          %130 = vsyncadd [#allocation6], %s129
          %s131 = sshll.u32 [#allocation5], 4
          %s132 = int_to_ptr.vmem [resolvable:$true] %s131
          %137 = dma.hbm_to_vmem [thread:$0]  %s1, 2048, %s132, [#allocation6], 512, 512, 32
        $region16: #{tpu_custom_call.1} parent=11 // pred_fallthru
          _
        // Predicated region
        $region17: #{tpu_custom_call.1} parent=11 // pred_check
          %p138 = pneg %p84
        $region18: #{tpu_custom_call.1} parent=11 // pred_check_branch
          %140 = sbr.rel (%p138) target = $region20
        $region19: #{tpu_custom_call.1} parent=11 // pred_region
          %s142 = ssub.s32 2048, 2048
          %143 = vsyncadd [#allocation6], %s142
          %s144 = sshll.u32 [#allocation7], 4
          %s145 = int_to_ptr.vmem [resolvable:$true] %s144
          %150 = dma.hbm_to_vmem [thread:$0]  %s2, 2048, %s145, [#allocation6], 512, 512, 32
        $region20: #{tpu_custom_call.1} parent=11 // pred_fallthru
          _
      $region12: #{tpu_custom_call.1} parent=5 // pred_fallthru
        _
      %p151 = scmp.lt.s32.totalorder %s16, 8
      // Predicated region
      $region21: #{tpu_custom_call.1} parent=5 // pred_check
        %p152 = pneg %p151
      $region22: #{tpu_custom_call.1} parent=5 // pred_check_branch
        %154 = sbr.rel (%p152) target = $region24
      $region23: #{tpu_custom_call.1} parent=5 // pred_region
        // Predicated region
        $region25: #{tpu_custom_call.1} parent=23 // pred_check
          %p155 = pneg %p36
        $region26: #{tpu_custom_call.1} parent=23 // pred_check_branch
          %157 = sbr.rel (%p155) target = $region28
        $region27: #{tpu_custom_call.1} parent=23 // pred_region
          %s158 = sand.u32 %s26, 1
          %s159 = scalar_lea.sflag [#allocation3], %s158
          %s160 = sand.u32 %s26, 1
          %s161 = smul.addr %s160, 32
          %s162 = scalar_lea.vmem [#allocation2], %s161
          %s164 = ssub.s32 512, 512
          %165 = vsyncadd %s159, %s164
          %s166 = smul.addr %s16, 4
          %s167 = smul.addr %s166, 128
          %s168 = scalar_lea.hbm %s0, %s167
          %s170 = sshll.u32 %s162, 4
          %s171 = int_to_ptr.vmem [resolvable:$true] %s170
          %173 = dma.hbm_to_vmem [thread:$0]  %s168, 512, %s171, %s159
        $region28: #{tpu_custom_call.1} parent=23 // pred_fallthru
          _
      $region24: #{tpu_custom_call.1} parent=5 // pred_fallthru
        _
      %p174 = scmp.le.s32.totalorder 1, %s16
      %p175 = scmp.lt.s32.totalorder %s16, 9
      %p176 = pnand %p174, %p175
      %p177 = pneg %p176
      // Predicated region
      $region29: #{tpu_custom_call.1} parent=5 // pred_check
        _
      $region30: #{tpu_custom_call.1} parent=5 // pred_check_branch
        %179 = sbr.rel (%p176) target = $region32
      $region31: #{tpu_custom_call.1} parent=5 // pred_region
        %s180 = ssub.s32 %s16, 1
        %s181 = sand.u32 %s29, 1
        %s182 = scalar_lea.sflag [#allocation3], %s181
        %s183 = sand.u32 %s29, 1
        %s184 = smul.addr %s183, 32
        %s185 = scalar_lea.vmem [#allocation2], %s184
        // Predicated region
        $region33: #{tpu_custom_call.1} parent=31 // pred_check
          %p186 = pneg %p42
        $region34: #{tpu_custom_call.1} parent=31 // pred_check_branch
          %188 = sbr.rel (%p186) target = $region36
        $region35: #{tpu_custom_call.1} parent=31 // pred_region
          %189 = dma.done %s182, 512
        $region36: #{tpu_custom_call.1} parent=31 // pred_fallthru
          _
        // Predicated region
        $region37: #{tpu_custom_call.1} parent=31 // pred_check
          %p190 = pneg %p63
        $region38: #{tpu_custom_call.1} parent=31 // pred_check_branch
          %192 = sbr.rel (%p190) target = $region40
        $region39: #{tpu_custom_call.1} parent=31 // pred_region
          %193 = dma.done [#allocation6], 2048
        $region40: #{tpu_custom_call.1} parent=31 // pred_fallthru
          _
        // Predicated region
        $region41: #{tpu_custom_call.1} parent=31 // pred_check
          %p194 = pneg %p84
        $region42: #{tpu_custom_call.1} parent=31 // pred_check_branch
          %196 = sbr.rel (%p194) target = $region44
        $region43: #{tpu_custom_call.1} parent=31 // pred_region
          %197 = dma.done [#allocation6], 2048
        $region44: #{tpu_custom_call.1} parent=31 // pred_fallthru
          _
        %s198 = sand.u32 %s29, 1
        %s199 = scalar_lea.sflag [#allocation3], %s198
        %s200 = sand.u32 %s29, 1
        %s201 = smul.addr %s200, 32
        %s202 = scalar_lea.vmem [#allocation2], %s201
        %p203 = pneg %p42
        %p204 = pneg %p39
        %p205 = pneg %p63
        %p206 = pneg %p60
        %p207 = pneg %p84
        %p208 = pneg %p81
        %p209 = pneg %p110
        %p210 = pneg %p107
        %s211 = sand.u32 %s97, 1
        %s212 = scalar_lea.sflag [#allocation4], %s211
        %s213 = sand.u32 %s97, 1
        %s214 = smul.addr %s213, 32
        %s215 = scalar_lea.vmem [#allocation8], %s214
        %v216 = vld [vmem:[%s185] sm:$0xff]
        %v217 = vld [vmem:[%s185 + $0x8] sm:$0xff]
        %v218 = vld [vmem:[%s185 + $0x10] sm:$0xff]
        %v219 = vld [vmem:[%s185 + $0x18] sm:$0xff]
        %v220 = vadd.f32 %v216, %v217
        %v221 = vadd.f32 %v220, %v218
        %v222 = vadd.f32 %v221, %v219
        %223 = vadd.xlane.f32.xlu0 %v222
        %v224 = vpop.xlane.xlu0 %223
        %v225 = vmul.f32 %v224, 0.001953125
        %v226 = vsub.f32 %v216, %v225
        %v227 = vsub.f32 %v217, %v225
        %v228 = vsub.f32 %v218, %v225
        %v229 = vsub.f32 %v219, %v225
        %v230 = vmul.f32 %v226, %v226
        %v231 = vmul.f32 %v227, %v227
        %v232 = vmul.f32 %v228, %v228
        %v233 = vmul.f32 %v229, %v229
        %v234 = vadd.f32 %v230, %v231
        %v235 = vadd.f32 %v234, %v232
        %v236 = vadd.f32 %v235, %v233
        %237 = vadd.xlane.f32.xlu0 %v236
        %v238 = vpop.xlane.xlu0 %237
        %v239 = vmul.f32 %v238, 0.001953125
        %v240 = vadd.f32 %v239, 1e-06
        %v241 = vrsqrt.pop %v240
        %p242 = scmp.lt.s32.totalorder %s21, 0
        %s243 = ssub.s32 0, %s21
        %s244 = scalar_select %p242, %s243, %s21
        %s245 = sand.u32 %s244, 3
        %s246 = ssub.s32 0, %s245
        %s247 = scalar_select %p242, %s246, %s245
        %p248 = scmp.ne.s32.totalorder %s247, 0
        %p249 = scmp.lt.s32.totalorder %s247, 0
        %p250 = pnand %p249, %p248
        %p251 = pneg %p250
        %s252 = sadd.s32 %s247, 4
        %s253 = scalar_select %p251, %s252, %s247
        %s254 = smul.u32 %s253, 4
        %s255 = smul.addr %s254, 8
        %s256 = scalar_lea.vmem [#allocation5], %s255
        %v257 = vld [vmem:[%s256] sm:$0xff]
        %v258 = vld [vmem:[%s256 + $0x8] sm:$0xff]
        %v259 = vld [vmem:[%s256 + $0x10] sm:$0xff]
        %v260 = vld [vmem:[%s256 + $0x18] sm:$0xff]
        %s261 = smul.addr %s254, 8
        %s262 = scalar_lea.vmem [#allocation7], %s261
        %v263 = vld [vmem:[%s262] sm:$0xff]
        %v264 = vld [vmem:[%s262 + $0x8] sm:$0xff]
        %v265 = vld [vmem:[%s262 + $0x10] sm:$0xff]
        %v266 = vld [vmem:[%s262 + $0x18] sm:$0xff]
        %v267 = vmul.f32 %v257, %v241
        %v268 = vmul.f32 %v258, %v241
        %v269 = vmul.f32 %v259, %v241
        %v270 = vmul.f32 %v260, %v241
        %v271 = vmul.f32 %v225, %v267
        %v272 = vmul.f32 %v225, %v268
        %v273 = vmul.f32 %v225, %v269
        %v274 = vmul.f32 %v225, %v270
        %v275 = vsub.f32 %v263, %v271
        %v276 = vsub.f32 %v264, %v272
        %v277 = vsub.f32 %v265, %v273
        %v278 = vsub.f32 %v266, %v274
        %v279 = vmul.f32 %v216, %v267
        %v280 = vmul.f32 %v217, %v268
        %v281 = vmul.f32 %v218, %v269
        %v282 = vmul.f32 %v219, %v270
        %v283 = vadd.f32 %v279, %v275
        %v284 = vadd.f32 %v280, %v276
        %v285 = vadd.f32 %v281, %v277
        %v286 = vadd.f32 %v282, %v278
        %287 = vst [vmem:[%s215] sm:$0xff] %v283
        %288 = vst [vmem:[%s215 + $0x8] sm:$0xff] %v284
        %289 = vst [vmem:[%s215 + $0x10] sm:$0xff] %v285
        %290 = vst [vmem:[%s215 + $0x18] sm:$0xff] %v286
        %s291 = sand.u32 %s97, 1
        %s292 = scalar_lea.sflag [#allocation4], %s291
        %s293 = sand.u32 %s97, 1
        %s294 = smul.addr %s293, 32
        %s295 = scalar_lea.vmem [#allocation8], %s294
        // Predicated region
        $region45: #{tpu_custom_call.1} parent=31 // pred_check
          %p296 = pneg %p107
        $region46: #{tpu_custom_call.1} parent=31 // pred_check_branch
          %298 = sbr.rel (%p296) target = $region48
        $region47: #{tpu_custom_call.1} parent=31 // pred_region
          %s300 = ssub.s32 512, 512
          %301 = vsyncadd %s292, %s300
          %s302 = smul.addr %s21, 4
          %s303 = smul.addr %s302, 128
          %s304 = scalar_lea.hbm %s3, %s303
          %s306 = sshll.u32 %s295, 4
          %s307 = int_to_ptr.vmem [resolvable:$true] %s306
          %309 = dma.vmem_to_hbm [thread:$0]  %s307, 512, %s304, %s292
        $region48: #{tpu_custom_call.1} parent=31 // pred_fallthru
          _
      $region32: #{tpu_custom_call.1} parent=5 // pred_fallthru
        _
      %p310 = scmp.le.s32.totalorder 2, %s16
      // Predicated region
      $region49: #{tpu_custom_call.1} parent=5 // pred_check
        %p311 = pneg %p310
      $region50: #{tpu_custom_call.1} parent=5 // pred_check_branch
        %313 = sbr.rel (%p311) target = $region52
      $region51: #{tpu_custom_call.1} parent=5 // pred_region
        %s314 = ssub.s32 %s16, 2
        // Predicated region
        $region53: #{tpu_custom_call.1} parent=51 // pred_check
          %p315 = pneg %p113
        $region54: #{tpu_custom_call.1} parent=51 // pred_check_branch
          %317 = sbr.rel (%p315) target = $region56
        $region55: #{tpu_custom_call.1} parent=51 // pred_region
          %s318 = sand.u32 %s98, 1
          %s319 = scalar_lea.sflag [#allocation4], %s318
          %s320 = sand.u32 %s98, 1
          %s321 = smul.addr %s320, 32
          %s322 = scalar_lea.vmem [#allocation8], %s321
          %323 = dma.done %s319, 512
        $region56: #{tpu_custom_call.1} parent=51 // pred_fallthru
          _
      $region52: #{tpu_custom_call.1} parent=5 // pred_fallthru
        _
    $region6: #{tpu_custom_call.1} parent=1 // loop_footer
      %s20 = sadd.s32 1, %s16
    $region7: #{tpu_custom_call.1} parent=1 // loop_footer_branch
      %15 = sbr.rel target = $region3
    $region8: #{tpu_custom_call.1} parent=1 // loop_exit
      _
    %324 = vsyncpa [#allocation3], 1
    %s325 = scalar_lea.sflag [#allocation3], 1
    %326 = vsyncpa %s325, 1
    %327 = vsyncpa [#allocation6], 1
    %328 = vsyncpa [#allocation4], 1
    %s329 = scalar_lea.sflag [#allocation4], 1
    %330 = vsyncpa %s329, 1

</llo_original>
